<compile_context>
chip_gen: v7x
topology: tpu7x:2x2x1
jax: 0.10.0
libtpu: 0.0.40
codegen_flags: <defaults>
</compile_context>

<pallas_src>
import jax
import jax.numpy as jnp
from jax.experimental import pallas as pl
from jax.experimental.pallas import tpu as pltpu

LN_EPS = 1e-12
TYPE_PAD = 128      # lane-dense padding of the 4 type logits
HEAD_PAD = 512      # pad num_answers to a multiple of this (>=1.5 MiB w2 tiles)


def _vmem_limit_bytes():
    # ~75% of physical VMEM, capped at 96 MiB (=> ~48 MiB on v7x, 96 MiB v5e/v6e).
    try:
        cap = pltpu.get_tpu_info().vmem_capacity_bytes
        return int(min(cap * 3 // 4, 96 * 1024 * 1024))
    except Exception:
        return 48 * 1024 * 1024


_VMEM_LIMIT = _vmem_limit_bytes()
_VMEM_SPEC = pl.BlockSpec(memory_space=pltpu.MemorySpace.VMEM)


# ----------------------------- in-kernel math ------------------------------

def _gelu(x):
    # tanh-form GeLU (EUP tanh slot); tiny, documented deviation from erf form.
    c = 0.7978845608028654  # sqrt(2/pi)
    return 0.5 * x * (1.0 + jnp.tanh(c * (x + 0.044715 * x * x * x)))


def _layernorm(x, g, b):
    mu = jnp.mean(x, axis=-1, keepdims=True)
    var = jnp.mean(jnp.square(x - mu), axis=-1, keepdims=True)
    return (x - mu) * jax.lax.rsqrt(var + LN_EPS) * g + b


def _bf16(x):
    return x.astype(jnp.bfloat16)


# ------------------------------- kernels -----------------------------------

def _encoder_type_kernel(fpool_ref, ppool_ref, sent_ref,
                         wf_ref, wp_ref, ws_ref, eb_ref,
                         tw1_ref, tvec_ref, tw2_ref, tb2_ref,
                         x_ref, tl_ref, wts_ref):
    # TODO(synk): the real LXRTEncoder cross-modal transformer has no clean
    # Pallas equivalent here; replaced by a pooled linear + tanh stand-in
    # producing the same (B, hid_dim) pooled feature.
    h = (jnp.dot(fpool_ref[...], wf_ref[...], preferred_element_type=jnp.float32)
         + jnp.dot(ppool_ref[...], wp_ref[...], preferred_element_type=jnp.float32)
         + jnp.dot(sent_ref[...], ws_ref[...], preferred_element_type=jnp.float32)
         + eb_ref[...])
    xb = _bf16(jnp.tanh(h))                               # (B, H) bf16
    x_ref[...] = xb

    # type_fc: Linear -> GeLU -> LayerNorm -> Linear (output padded to 128 lanes)
    tvec = tvec_ref[...]                                  # (3, 2H): b1, g1, be1
    t = _gelu(jnp.dot(xb, tw1_ref[...],
                      preferred_element_type=jnp.float32) + tvec[0:1])
    t = _layernorm(t, tvec[1:2], tvec[2:3])
    tl = (jnp.dot(_bf16(t), tw2_ref[...], preferred_element_type=jnp.float32)
          + tb2_ref[...])                                 # (B, TYPE_PAD)
    tl_ref[...] = tl

    # softmax over the 4 real type logits (padded lanes masked), f32 stats
    col = jax.lax.broadcasted_iota(jnp.int32, tl.shape, 1)
    masked = jnp.where(col < 4, tl, -1e30)
    m = jnp.max(masked, axis=-1, keepdims=True)
    e = jnp.exp(masked - m)
    wts_ref[...] = e * pl.reciprocal(jnp.sum(e, axis=-1, keepdims=True),
                                     approx=True)


def _branch_kernel(x_ref, wts_ref, w1_ref, v1_ref, w2_ref, v2_ref, w1c_ref,
                   part_ref):
    # grid step i = branch i (yesno / number / other / color); "parallel":
    # every step writes its own partial block, no shared accumulator.
    i = pl.program_id(0)
    wts = wts_ref[...]                                    # (B, TYPE_PAD) resident
    col = jax.lax.broadcasted_iota(jnp.int32, wts.shape, 1)
    sc = jnp.sum(jnp.where(col == i, wts, 0.0), axis=-1, keepdims=True)  # (B, 1)

    xb = x_ref[...]                                       # (B, H) bf16
    v1 = v1_ref[...]                                      # (3, 2H): b1, g1, be1
    h = _gelu(jnp.dot(xb, w1_ref[...], preferred_element_type=jnp.float32)
              + v1[0:1])
    h = _layernorm(h, v1[1:2], v1[2:3])
    v2 = v2_ref[...]                                      # (3, H): b2, g2, be2
    h = _gelu(jnp.dot(_bf16(h), w2_ref[...], preferred_element_type=jnp.float32)
              + v2[0:1])
    h = _layernorm(h, v2[1:2], v2[2:3])

    v = h * sc                                            # scale by type weight
    # x_cat @ logit_fc1.w1 distributed over branches:
    #   x_cat @ W1 == sum_i v_i @ (W1[iH:(i+1)H] + W1[4H:5H])
    part_ref[...] = jnp.dot(_bf16(v), w1c_ref[...],
                            preferred_element_type=jnp.float32)


def _mid_kernel(part_ref, fvec_ref, fw2_ref, fb2_ref, hw1_ref, hvec_ref,
                hid_ref, hhead_ref):
    # sum of branch partials -> logit_fc1 epilogue -> logit_fc first layer
    acc = jnp.sum(part_ref[...], axis=0)                  # (B, 2H) f32
    fv = fvec_ref[...]                                    # (3, 2H): b1, g1, be1
    z = _layernorm(_gelu(acc + fv[0:1]), fv[1:2], fv[2:3])
    hidden = (jnp.dot(_bf16(z), fw2_ref[...],
                      preferred_element_type=jnp.float32) + fb2_ref[...])
    hid_ref[...] = hidden                                  # (B, H) f32

    hv = hvec_ref[...]                                     # (3, 2H): b1, g1, be1
    hh = _gelu(jnp.dot(_bf16(hidden), hw1_ref[...],
                       preferred_element_type=jnp.float32) + hv[0:1])
    hh = _layernorm(hh, hv[1:2], hv[2:3])
    hhead_ref[...] = _bf16(hh)                             # (B, 2H) bf16


def _head_kernel(h_ref, w2_ref, b2_ref, o_ref):
    # pure weight-streaming matmul over lane-dense N tiles
    o_ref[...] = (jnp.dot(h_ref[...], w2_ref[...],
                          preferred_element_type=jnp.float32) + b2_ref[...])


# ----------------------------- pallas wrappers ------------------------------

def _run_encoder_type(fpool, ppool, sent_pooled, p):
    B = fpool.shape[0]
    H = p["enc_wf"].shape[1]
    return pl.pallas_call(
        _encoder_type_kernel,
        out_shape=(jax.ShapeDtypeStruct((B, H), jnp.bfloat16),
                   jax.ShapeDtypeStruct((B, TYPE_PAD), jnp.float32),
                   jax.ShapeDtypeStruct((B, TYPE_PAD), jnp.float32)),
        in_specs=[_VMEM_SPEC] * 11,
        out_specs=(_VMEM_SPEC, _VMEM_SPEC, _VMEM_SPEC),
        compiler_params=pltpu.CompilerParams(vmem_limit_bytes=_VMEM_LIMIT),
    )(fpool, ppool, sent_pooled,
      p["enc_wf"], p["enc_wp"], p["enc_ws"], p["enc_b"],
      p["t_w1"], p["t_vec"], p["t_w2"], p["t_b2"])


def _run_branches(x, wts_pad, p):
    B, H = x.shape
    H2 = p["br_w1"].shape[2]                              # 2H
    const2 = lambda i: (0, 0)
    br3 = lambda i: (i, 0, 0)
    return pl.pallas_call(
        _branch_kernel,
        out_shape=jax.ShapeDtypeStruct((4, B, H2), jnp.float32),
        grid=(4,),
        in_specs=[
            pl.BlockSpec((B, H), const2),                 # x (resident, bf16)
            pl.BlockSpec((B, TYPE_PAD), const2),          # type softmax (resident)
            pl.BlockSpec((None, H, H2), br3),             # branch W1 (bf16)
            pl.BlockSpec((None, 3, H2), br3),             # branch b1/g1/be1
            pl.BlockSpec((None, H2, H), br3),             # branch W2 (bf16)
            pl.BlockSpec((None, 3, H), br3),              # branch b2/g2/be2
            pl.BlockSpec((None, H, H2), br3),             # folded logit_fc1 W1 seg
        ],
        out_specs=pl.BlockSpec((None, B, H2), br3),       # per-branch partial
        compiler_params=pltpu.CompilerParams(
            dimension_semantics=("parallel",),            # both v7x TCs stream weights
            vmem_limit_bytes=_VMEM_LIMIT),
    )(x, wts_pad, p["br_w1"], p["br_v1"], p["br_w2"], p["br_v2"], p["fc1_w1c"])


def _run_mid(partials, p):
    _, B, H2 = partials.shape
    H = p["fc1_w2"].shape[1]
    return pl.pallas_call(
        _mid_kernel,
        out_shape=(jax.ShapeDtypeStruct((B, H), jnp.float32),
                   jax.ShapeDtypeStruct((B, H2), jnp.bfloat16)),
        in_specs=[_VMEM_SPEC] * 6,
        out_specs=(_VMEM_SPEC, _VMEM_SPEC),
        compiler_params=pltpu.CompilerParams(vmem_limit_bytes=_VMEM_LIMIT),
    )(partials, p["fc1_vec"], p["fc1_w2"], p["fc1_b2"],
      p["lfc_w1"], p["lfc_vec"])


def _pick_tile(n):
    for t in (512, 256, 128):
        if n % t == 0:
            return t
    return n


def _run_head(h_head, p):
    B, H2 = h_head.shape
    Np = p["w2"].shape[1]                                 # padded to HEAD_PAD multiple
    tn = _pick_tile(Np)
    const = lambda j: (0, 0)
    coln = lambda j: (0, j)
    return pl.pallas_call(
        _head_kernel,
        out_shape=jax.ShapeDtypeStruct((B, Np), jnp.float32),
        grid=(Np // tn,),
        in_specs=[
            pl.BlockSpec((B, H2), const),                 # head activation (bf16)
            pl.BlockSpec((H2, tn), coln),                 # logit_fc W2 tile (bf16)
            pl.BlockSpec((1, tn), coln),                  # logit_fc b2 tile
        ],
        out_specs=pl.BlockSpec((B, tn), coln),
        compiler_params=pltpu.CompilerParams(
            dimension_semantics=("parallel",),
            vmem_limit_bytes=_VMEM_LIMIT),
    )(h_head, p["w2"], p["b2"])


# ------------------------------ parameters ----------------------------------

def init_params(key, F, P, V, E, H, num_answers):
    keys = iter(jax.random.split(key, 64))

    def w(din, dout):
        return 0.02 * jax.random.normal(next(keys), (din, dout), jnp.float32)

    def head(din, dmid, dout):
        return {"w1": w(din, dmid), "b1": jnp.zeros((dmid,), jnp.float32),
                "g1": jnp.ones((dmid,), jnp.float32),
                "be1": jnp.zeros((dmid,), jnp.float32),
                "w2": w(dmid, dout), "b2": jnp.zeros((dout,), jnp.float32)}

    def branch(d, dmid):
        b = head(d, dmid, d)
        b["g2"] = jnp.ones((d,), jnp.float32)
        b["be2"] = jnp.zeros((d,), jnp.float32)
        return b

    return {
        "sent_emb": 0.02 * jax.random.normal(next(keys), (V, E), jnp.float32),
        "encoder": {"wf": w(F, H), "wp": w(P, H), "ws": w(E, H),
                    "b": jnp.zeros((H,), jnp.float32)},
        "type_fc": head(H, 2 * H, 4),
        "yesno_fc": branch(H, 2 * H),
        "number_fc": branch(H, 2 * H),
        "other_fc": branch(H, 2 * H),
        "color_fc": branch(H, 2 * H),
        "logit_fc1": head(5 * H, 2 * H, H),
        "logit_fc": head(H, 2 * H, num_answers),
    }


def pack_params(params):
    """bf16-cast, stack branch weights, pad outputs lane-dense, fold fc1 segments."""
    bf = _bf16
    H = params["encoder"]["wf"].shape[1]
    H2 = 2 * H

    def vecs(p, keys):
        return jnp.stack([p[k].reshape(-1) for k in keys], axis=0)

    enc = params["encoder"]
    tfc = params["type_fc"]
    tw2 = jnp.zeros((H2, TYPE_PAD), jnp.float32).at[:, :4].set(tfc["w2"])
    tb2 = jnp.zeros((1, TYPE_PAD), jnp.float32).at[:, :4].set(tfc["b2"][None, :])

    branches = [params[k] for k in ("yesno_fc", "number_fc", "other_fc", "color_fc")]
    fc1 = params["logit_fc1"]
    # x_cat @ W1 == sum_i v_i @ (W1[iH:(i+1)H] + W1[4H:5H])
    w1c = jnp.stack([fc1["w1"][i * H:(i + 1) * H] + fc1["w1"][4 * H:5 * H]
                     for i in range(4)], axis=0)

    lfc = params["logit_fc"]
    na = lfc["w2"].shape[1]
    npad = ((na + HEAD_PAD - 1) // HEAD_PAD) * HEAD_PAD
    lw2 = jnp.zeros((H2, npad), jnp.float32).at[:, :na].set(lfc["w2"])
    lb2 = jnp.zeros((1, npad), jnp.float32).at[:, :na].set(lfc["b2"][None, :])

    return {
        "sent_emb": params["sent_emb"],
        "enc_type": {
            "enc_wf": bf(enc["wf"]), "enc_wp": bf(enc["wp"]),
            "enc_ws": bf(enc["ws"]), "enc_b": enc["b"][None, :],
            "t_w1": bf(tfc["w1"]), "t_vec": vecs(tfc, ("b1", "g1", "be1")),
            "t_w2": bf(tw2), "t_b2": tb2,
        },
        "branches": {
            "br_w1": bf(jnp.stack([b["w1"] for b in branches], 0)),   # (4,H,2H)
            "br_v1": jnp.stack([vecs(b, ("b1", "g1", "be1")) for b in branches], 0),
            "br_w2": bf(jnp.stack([b["w2"] for b in branches], 0)),   # (4,2H,H)
            "br_v2": jnp.stack([vecs(b, ("b2", "g2", "be2")) for b in branches], 0),
            "fc1_w1c": bf(w1c),                                       # (4,H,2H)
        },
        "mid": {
            "fc1_vec": vecs(fc1, ("b1", "g1", "be1")),
            "fc1_w2": bf(fc1["w2"]), "fc1_b2": fc1["b2"][None, :],
            "lfc_w1": bf(lfc["w1"]), "lfc_vec": vecs(lfc, ("b1", "g1", "be1")),
        },
        "logit_fc": {"w2": bf(lw2), "b2": lb2},
        "num_answers": na,
    }


# ------------------------------- forward -------------------------------------

def vqa_forward(packed, feat, pos, sent_ids, ret_hid=False, typefeats=None):
    B = feat.shape[0]
    # glue: token-embedding gather + pooling (pre-pooled/bf16 so the encoder
    # kernel's un-gridded inputs stay tiny on v7x's 64 MiB VMEM)
    emb = packed["sent_emb"][sent_ids]                    # (B, T, E)
    sent_pooled = _bf16(jnp.mean(emb, axis=1))            # (B, E)
    fpool = _bf16(jnp.mean(feat, axis=1))                 # (B, F)
    ppool = _bf16(jnp.mean(pos, axis=1))                  # (B, 4)

    x, tl_pad, wts_pad = _run_encoder_type(fpool, ppool, sent_pooled,
                                           packed["enc_type"])
    type_logit = tl_pad[:, :4]                            # (B, 4)
    if typefeats is not None:
        wts_pad = jnp.zeros((B, TYPE_PAD), jnp.float32).at[:, :4].set(
            typefeats + 1e-8)

    # 4 branch MLPs * type weights, each emitting its v_i @ fc1.W1 partial
    partials = _run_branches(x, wts_pad, packed["branches"])          # (4,B,2H)
    # fc1 epilogue + logit_fc first Linear/GeLU/LN (hoisted out of N-tile grid)
    hidden_vec, h_head = _run_mid(partials, packed["mid"])
    # lane-dense weight-streaming head over answer tiles
    logit = _run_head(h_head, packed["logit_fc"])[:, :packed["num_answers"]]

    if not ret_hid:
        return logit, type_logit
    return hidden_vec, logit, type_logit


# --------------------------- pure-JAX reference -------------------------------

def _ref_forward(params, feat, pos, sent_ids, typefeats=None):
    gelu = lambda x: x * 0.5 * (1.0 + jax.lax.erf(x * 0.7071067811865476))
    ln = lambda x, g, b: (x - x.mean(-1, keepdims=True)) * jax.lax.rsqrt(
        x.var(-1, keepdims=True) + LN_EPS) * g + b

    def head(x, p):
        h = ln(gelu(x @ p["w1"] + p["b1"]), p["g1"], p["be1"])
        return h @ p["w2"] + p["b2"]

    def branch(x, p):
        h = ln(gelu(x @ p["w1"] + p["b1"]), p["g1"], p["be1"])
        return ln(gelu(h @ p["w2"] + p["b2"]), p["g2"], p["be2"])

    sent = params["sent_emb"][sent_ids].mean(1)
    enc = params["encoder"]
    x = jnp.tanh(feat.mean(1) @ enc["wf"] + pos.mean(1) @ enc["wp"]
                 + sent @ enc["ws"] + enc["b"])
    tl = head(x, params["type_fc"])
    wts = jax.nn.softmax(tl, axis=-1) if typefeats is None else typefeats + 1e-8
    vs = [branch(x, params[k]) * wts[:, i:i + 1] for i, k in
          enumerate(("yesno_fc", "number_fc", "other_fc", "color_fc"))]
    x_cat = jnp.concatenate(vs + [vs[0] + vs[1] + vs[2] + vs[3]], axis=1)
    hidden = head(x_cat, params["logit_fc1"])
    logit = head(hidden, params["logit_fc"])
    return hidden, logit, tl


# --------------------------------- main --------------------------------------

if __name__ == "__main__":
    # small synthetic shapes consistent with the forward signature
    B, O, F, P = 2, 8, 16, 4          # batch, objects, visual-feat, pos(4)
    T, V, E = 8, 50, 16               # tokens, vocab, token-embed dim
    H, NUM_ANSWERS = 32, 16           # hid_dim, num_answers

    key = jax.random.PRNGKey(0)
    k_feat, k_pos, k_sent, k_param, k_tf = jax.random.split(key, 5)

    feat = jax.random.normal(k_feat, (B, O, F), jnp.float32)
    pos = jax.random.uniform(k_pos, (B, O, P), jnp.float32)
    sent_ids = jax.random.randint(k_sent, (B, T), 0, V)

    params = init_params(k_param, F, P, V, E, H, NUM_ANSWERS)
    packed = pack_params(params)

    logit, type_logit = vqa_forward(packed, feat, pos, sent_ids)
    jax.block_until_ready((logit, type_logit))
    assert logit.shape == (B, NUM_ANSWERS)
    assert type_logit.shape == (B, 4)
    assert bool(jnp.all(jnp.isfinite(logit))) and bool(jnp.all(jnp.isfinite(type_logit)))

    # ret_hid=True path
    hidden_vec, logit2, type_logit2 = vqa_forward(packed, feat, pos, sent_ids,
                                                  ret_hid=True)
    jax.block_until_ready((hidden_vec, logit2, type_logit2))
    assert hidden_vec.shape == (B, H)
    assert bool(jnp.all(jnp.isfinite(hidden_vec)))

    # compare against f32 pure-JAX reference (bf16 weights + tanh-GeLU => loose tol)
    ref_hidden, ref_logit, ref_tl = _ref_forward(params, feat, pos, sent_ids)
    assert jnp.allclose(type_logit, ref_tl, atol=5e-2, rtol=5e-2)
    assert jnp.allclose(hidden_vec, ref_hidden, atol=5e-2, rtol=5e-2)
    assert jnp.allclose(logit, ref_logit, atol=5e-2, rtol=5e-2)

    # typefeats override path
    tf = jax.nn.softmax(jax.random.normal(k_tf, (B, 4), jnp.float32), axis=-1)
    logit_tf, tl_tf = vqa_forward(packed, feat, pos, sent_ids, typefeats=tf)
    jax.block_until_ready((logit_tf, tl_tf))
    _, ref_logit_tf, _ = _ref_forward(params, feat, pos, sent_ids, typefeats=tf)
    assert jnp.allclose(logit_tf, ref_logit_tf, atol=5e-2, rtol=5e-2)

    print("KERNEL_OK")
</pallas_src>

<mosaic_0001>
module attributes {stable_mosaic.version = 11 : i64} {
  func.func @_encoder_type_kernel(%arg0: memref<2x16xbf16, #tpu.memory_space<vmem>>, %arg1: memref<2x4xbf16, #tpu.memory_space<vmem>>, %arg2: memref<2x16xbf16, #tpu.memory_space<vmem>>, %arg3: memref<16x32xbf16, #tpu.memory_space<vmem>>, %arg4: memref<4x32xbf16, #tpu.memory_space<vmem>>, %arg5: memref<16x32xbf16, #tpu.memory_space<vmem>>, %arg6: memref<1x32xf32, #tpu.memory_space<vmem>>, %arg7: memref<32x64xbf16, #tpu.memory_space<vmem>>, %arg8: memref<3x64xf32, #tpu.memory_space<vmem>>, %arg9: memref<64x128xbf16, #tpu.memory_space<vmem>>, %arg10: memref<1x128xf32, #tpu.memory_space<vmem>>, %arg11: memref<2x32xbf16, #tpu.memory_space<vmem>>, %arg12: memref<2x128xf32, #tpu.memory_space<vmem>>, %arg13: memref<2x128xf32, #tpu.memory_space<vmem>>) attributes {dimension_semantics = [], scalar_prefetch = 0 : i64, scratch_operands = 0 : i64, tpu.core_type = #tpu.core_type<tc>} {
    %c0 = arith.constant 0 : index
    %c0_0 = arith.constant 0 : index
    %0 = vector.load %arg0[%c0, %c0_0] : memref<2x16xbf16, #tpu.memory_space<vmem>>, vector<2x16xbf16>
    %c0_1 = arith.constant 0 : index
    %c0_2 = arith.constant 0 : index
    %1 = vector.load %arg3[%c0_1, %c0_2] : memref<16x32xbf16, #tpu.memory_space<vmem>>, vector<16x32xbf16>
    %cst = arith.constant dense<0.000000e+00> : vector<2x32xf32>
    %2 = tpu.matmul %0, %1, %cst {dimension_numbers = #tpu.dot_dimension_numbers<[1], [0], [0], [1], [0, 0, 1, 1], [], []>} : vector<2x16xbf16>, vector<16x32xbf16>, vector<2x32xf32> -> vector<2x32xf32>
    %c0_3 = arith.constant 0 : index
    %c0_4 = arith.constant 0 : index
    %3 = vector.load %arg1[%c0_3, %c0_4] : memref<2x4xbf16, #tpu.memory_space<vmem>>, vector<2x4xbf16>
    %c0_5 = arith.constant 0 : index
    %c0_6 = arith.constant 0 : index
    %4 = vector.load %arg4[%c0_5, %c0_6] : memref<4x32xbf16, #tpu.memory_space<vmem>>, vector<4x32xbf16>
    %cst_7 = arith.constant dense<0.000000e+00> : vector<2x32xf32>
    %5 = tpu.matmul %3, %4, %cst_7 {dimension_numbers = #tpu.dot_dimension_numbers<[1], [0], [0], [1], [0, 0, 1, 1], [], []>} : vector<2x4xbf16>, vector<4x32xbf16>, vector<2x32xf32> -> vector<2x32xf32>
    %6 = arith.addf %2, %5 : vector<2x32xf32>
    %c0_8 = arith.constant 0 : index
    %c0_9 = arith.constant 0 : index
    %7 = vector.load %arg2[%c0_8, %c0_9] : memref<2x16xbf16, #tpu.memory_space<vmem>>, vector<2x16xbf16>
    %c0_10 = arith.constant 0 : index
    %c0_11 = arith.constant 0 : index
    %8 = vector.load %arg5[%c0_10, %c0_11] : memref<16x32xbf16, #tpu.memory_space<vmem>>, vector<16x32xbf16>
    %cst_12 = arith.constant dense<0.000000e+00> : vector<2x32xf32>
    %9 = tpu.matmul %7, %8, %cst_12 {dimension_numbers = #tpu.dot_dimension_numbers<[1], [0], [0], [1], [0, 0, 1, 1], [], []>} : vector<2x16xbf16>, vector<16x32xbf16>, vector<2x32xf32> -> vector<2x32xf32>
    %10 = arith.addf %6, %9 : vector<2x32xf32>
    %c0_13 = arith.constant 0 : index
    %c0_14 = arith.constant 0 : index
    %11 = vector.load %arg6[%c0_13, %c0_14] : memref<1x32xf32, #tpu.memory_space<vmem>>, vector<1x32xf32>
    %12 = vector.broadcast %11 : vector<1x32xf32> to vector<2x32xf32>
    %13 = arith.addf %10, %12 : vector<2x32xf32>
    %14 = math.tanh %13 : vector<2x32xf32>
    %15 = arith.truncf %14 : vector<2x32xf32> to vector<2x32xbf16>
    %c0_15 = arith.constant 0 : index
    %c0_16 = arith.constant 0 : index
    %16 = vector.load %arg11[%c0_15, %c0_16] : memref<2x32xbf16, #tpu.memory_space<vmem>>, vector<2x32xbf16>
    tpu.vector_store %arg11[%c0_15, %c0_16], %15 {strides = array<i32>} : memref<2x32xbf16, #tpu.memory_space<vmem>>, vector<2x32xbf16>,
    %c0_17 = arith.constant 0 : index
    %c0_18 = arith.constant 0 : index
    %17 = vector.load %arg8[%c0_17, %c0_18] : memref<3x64xf32, #tpu.memory_space<vmem>>, vector<3x64xf32>
    %c0_19 = arith.constant 0 : index
    %c0_20 = arith.constant 0 : index
    %18 = vector.load %arg7[%c0_19, %c0_20] : memref<32x64xbf16, #tpu.memory_space<vmem>>, vector<32x64xbf16>
    %cst_21 = arith.constant dense<0.000000e+00> : vector<2x64xf32>
    %19 = tpu.matmul %15, %18, %cst_21 {dimension_numbers = #tpu.dot_dimension_numbers<[1], [0], [0], [1], [0, 0, 1, 1], [], []>} : vector<2x32xbf16>, vector<32x64xbf16>, vector<2x64xf32> -> vector<2x64xf32>
    %20 = vector.extract_strided_slice %17 {offsets = [0, 0], sizes = [1, 64], strides = [1, 1]} : vector<3x64xf32> to vector<1x64xf32>
    %21 = vector.broadcast %20 : vector<1x64xf32> to vector<2x64xf32>
    %22 = arith.addf %19, %21 : vector<2x64xf32>
    %cst_22 = arith.constant 5.000000e-01 : f32
    %23 = vector.broadcast %cst_22 : f32 to vector<2x64xf32>
    %24 = arith.mulf %23, %22 : vector<2x64xf32>
    %cst_23 = arith.constant 4.471500e-02 : f32
    %25 = vector.broadcast %cst_23 : f32 to vector<2x64xf32>
    %26 = arith.mulf %25, %22 : vector<2x64xf32>
    %27 = arith.mulf %26, %22 : vector<2x64xf32>
    %28 = arith.mulf %27, %22 : vector<2x64xf32>
    %29 = arith.addf %22, %28 : vector<2x64xf32>
    %cst_24 = arith.constant 0.797884583 : f32
    %30 = vector.broadcast %cst_24 : f32 to vector<2x64xf32>
    %31 = arith.mulf %30, %29 : vector<2x64xf32>
    %32 = math.tanh %31 : vector<2x64xf32>
    %cst_25 = arith.constant 1.000000e+00 : f32
    %33 = vector.broadcast %cst_25 : f32 to vector<2x64xf32>
    %34 = arith.addf %33, %32 : vector<2x64xf32>
    %35 = arith.mulf %24, %34 : vector<2x64xf32>
    %36 = vector.extract_strided_slice %17 {offsets = [1, 0], sizes = [1, 64], strides = [1, 1]} : vector<3x64xf32> to vector<1x64xf32>
    %37 = vector.extract_strided_slice %17 {offsets = [2, 0], sizes = [1, 64], strides = [1, 1]} : vector<3x64xf32> to vector<1x64xf32>
    %cst_26 = arith.constant dense<0.000000e+00> : vector<2xf32>
    %38 = vector.multi_reduction <add>, %35, %cst_26 [1] : vector<2x64xf32> to vector<2xf32>
    %39 = vector.shape_cast %38 : vector<2xf32> to vector<2x1xf32>
    %cst_27 = arith.constant 6.400000e+01 : f32
    %40 = vector.broadcast %cst_27 : f32 to vector<2x1xf32>
    %41 = arith.divf %39, %40 : vector<2x1xf32>
    %42 = vector.broadcast %41 : vector<2x1xf32> to vector<2x64xf32>
    %43 = arith.subf %35, %42 : vector<2x64xf32>
    %44 = arith.mulf %43, %43 : vector<2x64xf32>
    %cst_28 = arith.constant dense<0.000000e+00> : vector<2xf32>
    %45 = vector.multi_reduction <add>, %44, %cst_28 [1] : vector<2x64xf32> to vector<2xf32>
    %46 = vector.shape_cast %45 : vector<2xf32> to vector<2x1xf32>
    %cst_29 = arith.constant 6.400000e+01 : f32
    %47 = vector.broadcast %cst_29 : f32 to vector<2x1xf32>
    %48 = arith.divf %46, %47 : vector<2x1xf32>
    %49 = vector.broadcast %41 : vector<2x1xf32> to vector<2x64xf32>
    %50 = arith.subf %35, %49 : vector<2x64xf32>
    %cst_30 = arith.constant 9.99999996E-13 : f32
    %51 = vector.broadcast %cst_30 : f32 to vector<2x1xf32>
    %52 = arith.addf %48, %51 : vector<2x1xf32>
    %53 = math.rsqrt %52 : vector<2x1xf32>
    %54 = vector.broadcast %53 : vector<2x1xf32> to vector<2x64xf32>
    %55 = arith.mulf %50, %54 : vector<2x64xf32>
    %56 = vector.broadcast %36 : vector<1x64xf32> to vector<2x64xf32>
    %57 = arith.mulf %55, %56 : vector<2x64xf32>
    %58 = vector.broadcast %37 : vector<1x64xf32> to vector<2x64xf32>
    %59 = arith.addf %57, %58 : vector<2x64xf32>
    %60 = arith.truncf %59 : vector<2x64xf32> to vector<2x64xbf16>
    %c0_31 = arith.constant 0 : index
    %c0_32 = arith.constant 0 : index
    %61 = vector.load %arg9[%c0_31, %c0_32] : memref<64x128xbf16, #tpu.memory_space<vmem>>, vector<64x128xbf16>
    %cst_33 = arith.constant dense<0.000000e+00> : vector<2x128xf32>
    %62 = tpu.matmul %60, %61, %cst_33 {dimension_numbers = #tpu.dot_dimension_numbers<[1], [0], [0], [1], [0, 0, 1, 1], [], []>} : vector<2x64xbf16>, vector<64x128xbf16>, vector<2x128xf32> -> vector<2x128xf32>
    %c0_34 = arith.constant 0 : index
    %c0_35 = arith.constant 0 : index
    %63 = vector.load %arg10[%c0_34, %c0_35] : memref<1x128xf32, #tpu.memory_space<vmem>>, vector<1x128xf32>
    %64 = vector.broadcast %63 : vector<1x128xf32> to vector<2x128xf32>
    %65 = arith.addf %62, %64 : vector<2x128xf32>
    %c0_36 = arith.constant 0 : index
    %c0_37 = arith.constant 0 : index
    %66 = vector.load %arg12[%c0_36, %c0_37] : memref<2x128xf32, #tpu.memory_space<vmem>>, vector<2x128xf32>
    tpu.vector_store %arg12[%c0_36, %c0_37], %65 {strides = array<i32>} : memref<2x128xf32, #tpu.memory_space<vmem>>, vector<2x128xf32>,
    %67 = tpu.iota {dimensions = array<i32: 1>} : vector<2x128xi32>
    %c4_i32 = arith.constant 4 : i32
    %68 = vector.broadcast %c4_i32 : i32 to vector<2x128xi32>
    %69 = arith.cmpi slt, %67, %68 : vector<2x128xi32>
    %cst_38 = arith.constant -1.000000e+30 : f32
    %70 = vector.broadcast %cst_38 : f32 to vector<2x128xf32>
    %71 = arith.select %69, %65, %70 : vector<2x128xi1>, vector<2x128xf32>
    %cst_39 = arith.constant dense<0xFF800000> : vector<2xf32>
    %72 = vector.multi_reduction <maximumf>, %71, %cst_39 [1] : vector<2x128xf32> to vector<2xf32>
    %73 = vector.shape_cast %72 : vector<2xf32> to vector<2x1xf32>
    %74 = vector.broadcast %73 : vector<2x1xf32> to vector<2x128xf32>
    %75 = arith.subf %71, %74 : vector<2x128xf32>
    %76 = math.exp %75 : vector<2x128xf32>
    %cst_40 = arith.constant dense<0.000000e+00> : vector<2xf32>
    %77 = vector.multi_reduction <add>, %76, %cst_40 [1] : vector<2x128xf32> to vector<2xf32>
    %78 = vector.shape_cast %77 : vector<2xf32> to vector<2x1xf32>
    %79 = tpu.reciprocal %78 {approx = true} : vector<2x1xf32> -> vector<2x1xf32>
    %80 = vector.broadcast %79 : vector<2x1xf32> to vector<2x128xf32>
    %81 = arith.mulf %76, %80 : vector<2x128xf32>
    %c0_41 = arith.constant 0 : index
    %c0_42 = arith.constant 0 : index
    %82 = vector.load %arg13[%c0_41, %c0_42] : memref<2x128xf32, #tpu.memory_space<vmem>>, vector<2x128xf32>
    tpu.vector_store %arg13[%c0_41, %c0_42], %81 {strides = array<i32>} : memref<2x128xf32, #tpu.memory_space<vmem>>, vector<2x128xf32>,
    return
  }
}

</mosaic_0001>

<llo_original>
// kernel: tpu_custom_call.1
$region0: #{tpu_custom_call.1}
  #allocation0 [shape = 'u32[]', space=smem, size = 0x4, offset = 0x4, fixed_abs, tag = 'smem constant byte address 0x4 - core index']
  #allocation1 [shape = 'u32[144,128]{1,0:T(1,128)}', space=vmem, size = 0x12000, scoped, tag = 'internal scratch']
  %s0 = inlined_call_operand.hbm [shape: bf16[2,16], index: 0, kind: input, shape index: {}]
  %s1 = inlined_call_operand.hbm [shape: bf16[2,4], index: 1, kind: input, shape index: {}]
  %s2 = inlined_call_operand.hbm [shape: bf16[2,16], index: 2, kind: input, shape index: {}]
  %s3 = inlined_call_operand.hbm [shape: bf16[16,32], index: 3, kind: input, shape index: {}]
  %s4 = inlined_call_operand.vmem [shape: bf16[4,32], index: 4, kind: input, shape index: {}]
  %s5 = inlined_call_operand.hbm [shape: bf16[16,32], index: 5, kind: input, shape index: {}]
  %s6 = inlined_call_operand.hbm [shape: f32[1,32], index: 6, kind: input, shape index: {}]
  %s7 = inlined_call_operand.hbm [shape: bf16[32,64], index: 7, kind: input, shape index: {}]
  %s8 = inlined_call_operand.hbm [shape: f32[3,64], index: 8, kind: input, shape index: {}]
  %s9 = inlined_call_operand.vmem [shape: bf16[64,128], index: 9, kind: input, shape index: {}]
  %s10 = inlined_call_operand.vmem [shape: f32[1,128], index: 10, kind: input, shape index: {}]
  %s11 = inlined_call_operand.hbm [shape: bf16[2,32], index: 11, kind: output, shape index: {0}]
  %s12 = inlined_call_operand.hbm [shape: f32[2,128], index: 12, kind: output, shape index: {1}]
  %s13 = inlined_call_operand.hbm [shape: f32[2,128], index: 13, kind: output, shape index: {2}]
  %14 = xla_tuple %s11, %s12, %s13
  %s15 = sld [smem:[#allocation0]]
  $region102: #{tpu_custom_call.1} parent=0
    _
  %s17 = ssub.s32 1, %s15
  %s18 = scalar_select 0, %s17, %s15
  $region1: #{tpu_custom_call.1} parent=0
    #allocation2 [shape = 'u8[512]{0}', space=vmem, size = 0x400, scoped, tag = 'input window, operand 0, single buffered']
    #allocation3 [shape = 's32[1]{0}', space=sflag, size = 0x4, scoped, tag = 'scoped memory for tpu_custom_call.1']
    #allocation4 [shape = 's32[1]{0}', space=sflag, size = 0x4, scoped, tag = 'scoped memory for tpu_custom_call.1']
    #allocation5 [shape = 'u8[512]{0}', space=vmem, size = 0x400, scoped, tag = 'input window, operand 1, single buffered']
    #allocation6 [shape = 's32[1]{0}', space=sflag, size = 0x4, scoped, tag = 'scoped memory for tpu_custom_call.1']
    #allocation7 [shape = 'u8[512]{0}', space=vmem, size = 0x400, scoped, tag = 'input window, operand 2, single buffered']
    #allocation8 [shape = 'u8[4096]{0}', space=vmem, size = 0x1000, scoped, tag = 'input window, operand 3, single buffered']
    #allocation9 [shape = 's32[1]{0}', space=sflag, size = 0x4, scoped, tag = 'scoped memory for tpu_custom_call.1']
    #allocation10 [shape = 'u8[4096]{0}', space=vmem, size = 0x1000, scoped, tag = 'input window, operand 5, single buffered']
    #allocation11 [shape = 'u8[512]{0}', space=vmem, size = 0x400, scoped, tag = 'input window, operand 6, single buffered']
    #allocation12 [shape = 's32[1]{0}', space=sflag, size = 0x4, scoped, tag = 'scoped memory for tpu_custom_call.1']
    #allocation13 [shape = 'u8[8192]{0}', space=vmem, size = 0x2000, scoped, tag = 'input window, operand 7, single buffered']
    #allocation14 [shape = 'u8[2048]{0}', space=vmem, size = 0x800, scoped, tag = 'input window, operand 8, single buffered']
    #allocation15 [shape = 's32[1]{0}', space=sflag, size = 0x4, scoped, tag = 'scoped memory for tpu_custom_call.1']
    #allocation16 [shape = 'u8[512]{0}', space=vmem, size = 0x400, scoped, tag = 'output window, operand 0, single buffered']
    #allocation17 [shape = 'u8[1024]{0}', space=vmem, size = 0x400, scoped, tag = 'output window, operand 1, single buffered']
    #allocation18 [shape = 's32[1]{0}', space=sflag, size = 0x4, scoped, tag = 'scoped memory for tpu_custom_call.1']
    #allocation19 [shape = 'u8[1024]{0}', space=vmem, size = 0x400, scoped, tag = 'output window, operand 2, single buffered']
    %19 = vsyncpa [#allocation3], 0
    %20 = vsyncpa [#allocation6], 0
    %21 = vsyncpa [#allocation9], 0
    %22 = vsyncpa [#allocation12], 0
    %23 = vsyncpa [#allocation15], 0
    %24 = vsyncpa [#allocation4], 0
    %25 = vsyncpa [#allocation18], 0
    // Predicated region
    $region2: #{tpu_custom_call.1} parent=1 // pred_check
      _
    $region3: #{tpu_custom_call.1} parent=1 // pred_check_branch
      %27 = sbr.rel (0) target = $region5
    $region4: #{tpu_custom_call.1} parent=1 // pred_region
      %s29 = ssub.s32 16, 16
      %30 = vsyncadd [#allocation3], %s29
      %s32 = sshll.u32 [#allocation2], 4
      %s33 = int_to_ptr.vmem [resolvable:$true] %s32
      %35 = dma.hbm_to_vmem [thread:$0]  %s0, 16, %s33, [#allocation3]
    $region5: #{tpu_custom_call.1} parent=1 // pred_fallthru
      _
    // Predicated region
    $region6: #{tpu_custom_call.1} parent=1 // pred_check
      _
    $region7: #{tpu_custom_call.1} parent=1 // pred_check_branch
      %37 = sbr.rel (0) target = $region9
    $region8: #{tpu_custom_call.1} parent=1 // pred_region
      %s39 = ssub.s32 16, 16
      %40 = vsyncadd [#allocation6], %s39
      %s42 = sshll.u32 [#allocation5], 4
      %s43 = int_to_ptr.vmem [resolvable:$true] %s42
      %45 = dma.hbm_to_vmem [thread:$0]  %s1, 16, %s43, [#allocation6]
    $region9: #{tpu_custom_call.1} parent=1 // pred_fallthru
      _
    // Predicated region
    $region10: #{tpu_custom_call.1} parent=1 // pred_check
      _
    $region11: #{tpu_custom_call.1} parent=1 // pred_check_branch
      %47 = sbr.rel (0) target = $region13
    $region12: #{tpu_custom_call.1} parent=1 // pred_region
      %s49 = ssub.s32 16, 16
      %50 = vsyncadd [#allocation6], %s49
      %s52 = sshll.u32 [#allocation7], 4
      %s53 = int_to_ptr.vmem [resolvable:$true] %s52
      %55 = dma.hbm_to_vmem [thread:$0]  %s2, 16, %s53, [#allocation6]
    $region13: #{tpu_custom_call.1} parent=1 // pred_fallthru
      _
    // Predicated region
    $region14: #{tpu_custom_call.1} parent=1 // pred_check
      _
    $region15: #{tpu_custom_call.1} parent=1 // pred_check_branch
      %57 = sbr.rel (0) target = $region17
    $region16: #{tpu_custom_call.1} parent=1 // pred_region
      %s59 = ssub.s32 128, 128
      %60 = vsyncadd [#allocation9], %s59
      %s61 = sshll.u32 [#allocation8], 4
      %s62 = int_to_ptr.vmem [resolvable:$true] %s61
      %67 = dma.hbm_to_vmem [thread:$0]  %s3, 128, %s62, [#allocation9], 64, 64, 4
    $region17: #{tpu_custom_call.1} parent=1 // pred_fallthru
      _
    // Predicated region
    $region18: #{tpu_custom_call.1} parent=1 // pred_check
      _
    $region19: #{tpu_custom_call.1} parent=1 // pred_check_branch
      %69 = sbr.rel (0) target = $region21
    $region20: #{tpu_custom_call.1} parent=1 // pred_region
      _
    $region21: #{tpu_custom_call.1} parent=1 // pred_fallthru
      _
    // Predicated region
    $region22: #{tpu_custom_call.1} parent=1 // pred_check
      _
    $region23: #{tpu_custom_call.1} parent=1 // pred_check_branch
      %71 = sbr.rel (0) target = $region25
    $region24: #{tpu_custom_call.1} parent=1 // pred_region
      %s73 = ssub.s32 128, 128
      %74 = vsyncadd [#allocation9], %s73
      %s75 = sshll.u32 [#allocation10], 4
      %s76 = int_to_ptr.vmem [resolvable:$true] %s75
      %81 = dma.hbm_to_vmem [thread:$0]  %s5, 128, %s76, [#allocation9], 64, 64, 4
    $region25: #{tpu_custom_call.1} parent=1 // pred_fallthru
      _
    // Predicated region
    $region26: #{tpu_custom_call.1} parent=1 // pred_check
      _
    $region27: #{tpu_custom_call.1} parent=1 // pred_check_branch
      %83 = sbr.rel (0) target = $region29
    $region28: #{tpu_custom_call.1} parent=1 // pred_region
      %s85 = ssub.s32 16, 16
      %86 = vsyncadd [#allocation12], %s85
      %s88 = sshll.u32 [#allocation11], 4
      %s89 = int_to_ptr.vmem [resolvable:$true] %s88
      %91 = dma.hbm_to_vmem [thread:$0]  %s6, 16, %s89, [#allocation12]
    $region29: #{tpu_custom_call.1} parent=1 // pred_fallthru
      _
    // Predicated region
    $region30: #{tpu_custom_call.1} parent=1 // pred_check
      _
    $region31: #{tpu_custom_call.1} parent=1 // pred_check_branch
      %93 = sbr.rel (0) target = $region33
    $region32: #{tpu_custom_call.1} parent=1 // pred_region
      %s95 = ssub.s32 256, 256
      %96 = vsyncadd [#allocation12], %s95
      %s97 = sshll.u32 [#allocation13], 4
      %s98 = int_to_ptr.vmem [resolvable:$true] %s97
      %103 = dma.hbm_to_vmem [thread:$0]  %s7, 256, %s98, [#allocation12], 64, 64, 4
    $region33: #{tpu_custom_call.1} parent=1 // pred_fallthru
      _
    // Predicated region
    $region34: #{tpu_custom_call.1} parent=1 // pred_check
      _
    $region35: #{tpu_custom_call.1} parent=1 // pred_check_branch
      %105 = sbr.rel (0) target = $region37
    $region36: #{tpu_custom_call.1} parent=1 // pred_region
      %s107 = ssub.s32 64, 64
      %108 = vsyncadd [#allocation15], %s107
      %s110 = sshll.u32 [#allocation14], 4
      %s111 = int_to_ptr.vmem [resolvable:$true] %s110
      %113 = dma.hbm_to_vmem [thread:$0]  %s8, 64, %s111, [#allocation15]
    $region37: #{tpu_custom_call.1} parent=1 // pred_fallthru
      _
    // Predicated region
    $region38: #{tpu_custom_call.1} parent=1 // pred_check
      _
    $region39: #{tpu_custom_call.1} parent=1 // pred_check_branch
      %115 = sbr.rel (0) target = $region41
    $region40: #{tpu_custom_call.1} parent=1 // pred_region
      _
    $region41: #{tpu_custom_call.1} parent=1 // pred_fallthru
      _
    // Predicated region
    $region42: #{tpu_custom_call.1} parent=1 // pred_check
      _
    $region43: #{tpu_custom_call.1} parent=1 // pred_check_branch
      %117 = sbr.rel (0) target = $region45
    $region44: #{tpu_custom_call.1} parent=1 // pred_region
      _
    $region45: #{tpu_custom_call.1} parent=1 // pred_fallthru
      _
    // Predicated region
    $region46: #{tpu_custom_call.1} parent=1 // pred_check
      _
    $region47: #{tpu_custom_call.1} parent=1 // pred_check_branch
      %119 = sbr.rel (0) target = $region49
    $region48: #{tpu_custom_call.1} parent=1 // pred_region
      %120 = dma.done [#allocation3], 16
    $region49: #{tpu_custom_call.1} parent=1 // pred_fallthru
      _
    // Predicated region
    $region50: #{tpu_custom_call.1} parent=1 // pred_check
      _
    $region51: #{tpu_custom_call.1} parent=1 // pred_check_branch
      %122 = sbr.rel (0) target = $region53
    $region52: #{tpu_custom_call.1} parent=1 // pred_region
      %123 = dma.done [#allocation6], 16
    $region53: #{tpu_custom_call.1} parent=1 // pred_fallthru
      _
    // Predicated region
    $region54: #{tpu_custom_call.1} parent=1 // pred_check
      _
    $region55: #{tpu_custom_call.1} parent=1 // pred_check_branch
      %125 = sbr.rel (0) target = $region57
    $region56: #{tpu_custom_call.1} parent=1 // pred_region
      %126 = dma.done [#allocation6], 16
    $region57: #{tpu_custom_call.1} parent=1 // pred_fallthru
      _
    // Predicated region
    $region58: #{tpu_custom_call.1} parent=1 // pred_check
      _
    $region59: #{tpu_custom_call.1} parent=1 // pred_check_branch
      %128 = sbr.rel (0) target = $region61
    $region60: #{tpu_custom_call.1} parent=1 // pred_region
      %129 = dma.done [#allocation9], 128
    $region61: #{tpu_custom_call.1} parent=1 // pred_fallthru
      _
    // Predicated region
    $region62: #{tpu_custom_call.1} parent=1 // pred_check
      _
    $region63: #{tpu_custom_call.1} parent=1 // pred_check_branch
      %131 = sbr.rel (0) target = $region65
    $region64: #{tpu_custom_call.1} parent=1 // pred_region
      %132 = dma.done [#allocation9], 128
    $region65: #{tpu_custom_call.1} parent=1 // pred_fallthru
      _
    // Predicated region
    $region66: #{tpu_custom_call.1} parent=1 // pred_check
      _
    $region67: #{tpu_custom_call.1} parent=1 // pred_check_branch
      %134 = sbr.rel (0) target = $region69
    $region68: #{tpu_custom_call.1} parent=1 // pred_region
      %135 = dma.done [#allocation12], 16
    $region69: #{tpu_custom_call.1} parent=1 // pred_fallthru
      _
    // Predicated region
    $region70: #{tpu_custom_call.1} parent=1 // pred_check
      _
    $region71: #{tpu_custom_call.1} parent=1 // pred_check_branch
      %137 = sbr.rel (0) target = $region73
    $region72: #{tpu_custom_call.1} parent=1 // pred_region
      %138 = dma.done [#allocation12], 256
    $region73: #{tpu_custom_call.1} parent=1 // pred_fallthru
      _
    // Predicated region
    $region74: #{tpu_custom_call.1} parent=1 // pred_check
      _
    $region75: #{tpu_custom_call.1} parent=1 // pred_check_branch
      %140 = sbr.rel (0) target = $region77
    $region76: #{tpu_custom_call.1} parent=1 // pred_region
      %141 = dma.done [#allocation15], 64
    $region77: #{tpu_custom_call.1} parent=1 // pred_fallthru
      _
    %v143 = vld [vmem:[#allocation2] sm:$0x1]
    %v144 = vld [vmem:[#allocation8] sm:$0xf]
    %v145 = vld [vmem:[#allocation8 + $0x4] sm:$0xf]
    %v146 = vld [vmem:[#allocation5] sm:$0x1]
    %v147 = vld [vmem:[%s4] sm:$0x3]
    %vm148 = vcmask 31744
    %v150 = vsel %vm148, %v146, 0
    %vm152 = vcmask 1041408
    %v154 = vsel %vm152, %v147, 0
    %156 = vmatprep.subr.bf16.mxu0 0
    %157 = vmatpush1.bf16.msra.mxu0 %v154
    %158 = vmatprep.subr.bf16.mxu0 0
    %159 = vmatpush1.bf16.msra.mxu0 0
    %160 = vmatprep.subr.bf16.mxu0 0
    %161 = vmatpush1.bf16.msra.mxu0 0
    %162 = vmatprep.subr.bf16.mxu0 0
    %163 = vmatpush1.bf16.msra.mxu0 0
    %164 = vmatprep.subr.bf16.mxu0 0
    %165 = vmatpush1.bf16.msra.mxu0 0
    %166 = vmatprep.subr.bf16.mxu0 0
    %167 = vmatpush1.bf16.msra.mxu0 0
    %168 = vmatprep.subr.bf16.mxu0 0
    %169 = vmatpush1.bf16.msra.mxu0 0
    %170 = vmatprep.subr.bf16.mxu0 0
    %171 = vmatpush1.bf16.msra.mxu0 0
    %172 = vmatprep.subr.bf16.mxu0 0
    %173 = vmatpush1.bf16.msra.mxu0 0
    %174 = vmatprep.subr.bf16.mxu0 0
    %175 = vmatpush1.bf16.msra.mxu0 0
    %176 = vmatprep.subr.bf16.mxu0 0
    %177 = vmatpush1.bf16.msra.mxu0 0
    %178 = vmatprep.subr.bf16.mxu0 0
    %179 = vmatpush1.bf16.msra.mxu0 0
    %180 = vmatprep.subr.bf16.mxu0 0
    %181 = vmatpush1.bf16.msra.mxu0 0
    %182 = vmatprep.subr.bf16.mxu0 0
    %183 = vmatpush1.bf16.msra.mxu0 0
    %184 = vmatprep.subr.bf16.mxu0 0
    %185 = vmatpush1.bf16.msra.mxu0 0
    %186 = vmatprep.subr.bf16.mxu0 0
    %187 = vmatpush1.bf16.msra.mxu0 0
    %188 = vmatprep.mubr.bf16.mxu0 0
    %189 = vmatmul.mubr.bf16.gmra.mrb[0].mxu0 %v150
    %v190 = vpop.f32.mrb[0].mxu0
    %v191 = vadd.f32 0.0, %v190
    %v192 = vpop.f32.mrb[0].mxu0
    %v193 = vpop.f32.mrb[0].mxu0
    %v194 = vpop.f32.mrb[0].mxu0
    %195 = vdwg.mxu0
    %v198 = vunpack.c.l.b16 %v144
    %v199 = vunpack.c.l.b16 %v145
    %v200 = vpack.c.b16 %v199, %v198
    %vm202 = vcmask 130048
    %v204 = vsel %vm202, %v143, 0
    %206 = vmatprep.subr.bf16.mxu0 0
    %207 = vmatpush1.bf16.msra.mxu0 %v200
    %208 = vmatprep.subr.bf16.mxu0 0
    %209 = vmatpush1.bf16.msra.mxu0 0
    %210 = vmatprep.subr.bf16.mxu0 0
    %211 = vmatpush1.bf16.msra.mxu0 0
    %212 = vmatprep.subr.bf16.mxu0 0
    %213 = vmatpush1.bf16.msra.mxu0 0
    %214 = vmatprep.subr.bf16.mxu0 0
    %215 = vmatpush1.bf16.msra.mxu0 0
    %216 = vmatprep.subr.bf16.mxu0 0
    %217 = vmatpush1.bf16.msra.mxu0 0
    %218 = vmatprep.subr.bf16.mxu0 0
    %219 = vmatpush1.bf16.msra.mxu0 0
    %220 = vmatprep.subr.bf16.mxu0 0
    %221 = vmatpush1.bf16.msra.mxu0 0
    %222 = vmatprep.subr.bf16.mxu0 0
    %223 = vmatpush1.bf16.msra.mxu0 0
    %224 = vmatprep.subr.bf16.mxu0 0
    %225 = vmatpush1.bf16.msra.mxu0 0
    %226 = vmatprep.subr.bf16.mxu0 0
    %227 = vmatpush1.bf16.msra.mxu0 0
    %228 = vmatprep.subr.bf16.mxu0 0
    %229 = vmatpush1.bf16.msra.mxu0 0
    %230 = vmatprep.subr.bf16.mxu0 0
    %231 = vmatpush1.bf16.msra.mxu0 0
    %232 = vmatprep.subr.bf16.mxu0 0
    %233 = vmatpush1.bf16.msra.mxu0 0
    %234 = vmatprep.subr.bf16.mxu0 0
    %235 = vmatpush1.bf16.msra.mxu0 0
    %236 = vmatprep.subr.bf16.mxu0 0
    %237 = vmatpush1.bf16.msra.mxu0 0
    %238 = vmatprep.mubr.bf16.mxu0 0
    %239 = vmatmul.mubr.bf16.gmra.mrb[0].mxu0 %v204
    %v240 = vpop.f32.mrb[0].mxu0
    %v241 = vadd.f32 %v191, %v240
    %v242 = vpop.f32.mrb[0].mxu0
    %v243 = vpop.f32.mrb[0].mxu0
    %v244 = vpop.f32.mrb[0].mxu0
    %245 = vdwg.mxu0
    %v246 = vld [vmem:[#allocation7] sm:$0x1]
    %v247 = vld [vmem:[#allocation10] sm:$0xf]
    %v248 = vld [vmem:[#allocation10 + $0x4] sm:$0xf]
    %v251 = vunpack.c.l.b16 %v247
    %v252 = vunpack.c.l.b16 %v248
    %v253 = vpack.c.b16 %v252, %v251
    %v256 = vsel %vm202, %v246, 0
    %258 = vmatprep.subr.bf16.mxu0 0
    %259 = vmatpush1.bf16.msra.mxu0 %v253
    %260 = vmatprep.subr.bf16.mxu0 0
    %261 = vmatpush1.bf16.msra.mxu0 0
    %262 = vmatprep.subr.bf16.mxu0 0
    %263 = vmatpush1.bf16.msra.mxu0 0
    %264 = vmatprep.subr.bf16.mxu0 0
    %265 = vmatpush1.bf16.msra.mxu0 0
    %266 = vmatprep.subr.bf16.mxu0 0
    %267 = vmatpush1.bf16.msra.mxu0 0
    %268 = vmatprep.subr.bf16.mxu0 0
    %269 = vmatpush1.bf16.msra.mxu0 0
    %270 = vmatprep.subr.bf16.mxu0 0
    %271 = vmatpush1.bf16.msra.mxu0 0
    %272 = vmatprep.subr.bf16.mxu0 0
    %273 = vmatpush1.bf16.msra.mxu0 0
    %274 = vmatprep.subr.bf16.mxu0 0
    %275 = vmatpush1.bf16.msra.mxu0 0
    %276 = vmatprep.subr.bf16.mxu0 0
    %277 = vmatpush1.bf16.msra.mxu0 0
    %278 = vmatprep.subr.bf16.mxu0 0
    %279 = vmatpush1.bf16.msra.mxu0 0
    %280 = vmatprep.subr.bf16.mxu0 0
    %281 = vmatpush1.bf16.msra.mxu0 0
    %282 = vmatprep.subr.bf16.mxu0 0
    %283 = vmatpush1.bf16.msra.mxu0 0
    %284 = vmatprep.subr.bf16.mxu0 0
    %285 = vmatpush1.bf16.msra.mxu0 0
    %286 = vmatprep.subr.bf16.mxu0 0
    %287 = vmatpush1.bf16.msra.mxu0 0
    %288 = vmatprep.subr.bf16.mxu0 0
    %289 = vmatpush1.bf16.msra.mxu0 0
    %290 = vmatprep.mubr.bf16.mxu0 0
    %291 = vmatmul.mubr.bf16.gmra.mrb[0].mxu0 %v256
    %v292 = vpop.f32.mrb[0].mxu0
    %v293 = vadd.f32 0.0, %v292
    %v294 = vpop.f32.mrb[0].mxu0
    %v295 = vpop.f32.mrb[0].mxu0
    %v296 = vpop.f32.mrb[0].mxu0
    %297 = vdwg.mxu0
    %v298 = vadd.f32 %v241, %v293
    %v299 = vld [vmem:[#allocation11] sm:$0x1]
    %v301 = vlaneseq
    %v302 = vshrl.u32 %v301, 7
    %v303 = vsub.s32 0, %v302
    %v304 = vrot.slane %v299, %v303
    %v306 = vadd.f32 %v298, %v304
    %v307 = vtanh.pop %v306
    %v308 = vpack.c.bf16 %v307, %v307
    %vm309 = vcmask 253952
    %310 = vst.msk [vmem:[#allocation16] sm:$0x1] %vm309, %v308
    %v311 = vld [vmem:[#allocation14] sm:$0x7]
    %v312 = vld [vmem:[#allocation13] sm:$0xf]
    %v313 = vld [vmem:[#allocation13 + $0x4] sm:$0xf]
    %v314 = vld [vmem:[#allocation13 + $0x8] sm:$0xf]
    %v315 = vld [vmem:[#allocation13 + $0xc] sm:$0xf]
    %v316 = vlaneseq
    %v317 = vshrl.u32 %v316, 7
    %v318 = vsub.s32 0, %v317
    %v319 = vrot.slane %v311, %v318
    %v324 = vunpack.c.l.b16 %v312
    %v325 = vunpack.c.l.b16 %v313
    %v326 = vunpack.c.l.b16 %v314
    %v327 = vunpack.c.l.b16 %v315
    %v328 = vpack.c.b16 %v325, %v324
    %v329 = vpack.c.b16 %v327, %v326
    %vm332 = vcmask 261120
    %v334 = vsel %vm332, %v308, 0
    %336 = vmatprep.subr.bf16.mxu0 0
    %337 = vmatpush1.bf16.msra.mxu0 %v328
    %338 = vmatprep.subr.bf16.mxu0 0
    %339 = vmatpush1.bf16.msra.mxu0 %v329
    %340 = vmatprep.subr.bf16.mxu0 0
    %341 = vmatpush1.bf16.msra.mxu0 0
    %342 = vmatprep.subr.bf16.mxu0 0
    %343 = vmatpush1.bf16.msra.mxu0 0
    %344 = vmatprep.subr.bf16.mxu0 0
    %345 = vmatpush1.bf16.msra.mxu0 0
    %346 = vmatprep.subr.bf16.mxu0 0
    %347 = vmatpush1.bf16.msra.mxu0 0
    %348 = vmatprep.subr.bf16.mxu0 0
    %349 = vmatpush1.bf16.msra.mxu0 0
    %350 = vmatprep.subr.bf16.mxu0 0
    %351 = vmatpush1.bf16.msra.mxu0 0
    %352 = vmatprep.subr.bf16.mxu0 0
    %353 = vmatpush1.bf16.msra.mxu0 0
    %354 = vmatprep.subr.bf16.mxu0 0
    %355 = vmatpush1.bf16.msra.mxu0 0
    %356 = vmatprep.subr.bf16.mxu0 0
    %357 = vmatpush1.bf16.msra.mxu0 0
    %358 = vmatprep.subr.bf16.mxu0 0
    %359 = vmatpush1.bf16.msra.mxu0 0
    %360 = vmatprep.subr.bf16.mxu0 0
    %361 = vmatpush1.bf16.msra.mxu0 0
    %362 = vmatprep.subr.bf16.mxu0 0
    %363 = vmatpush1.bf16.msra.mxu0 0
    %364 = vmatprep.subr.bf16.mxu0 0
    %365 = vmatpush1.bf16.msra.mxu0 0
    %366 = vmatprep.subr.bf16.mxu0 0
    %367 = vmatpush1.bf16.msra.mxu0 0
    %368 = vmatprep.mubr.bf16.mxu0 0
    %369 = vmatmul.mubr.bf16.gmra.mrb[0].mxu0 %v334
    %v370 = vpop.f32.mrb[0].mxu0
    %v371 = vadd.f32 %v319, %v370
    %v372 = vpop.f32.mrb[0].mxu0
    %v373 = vpop.f32.mrb[0].mxu0
    %v374 = vpop.f32.mrb[0].mxu0
    %375 = vdwg.mxu0
    %v376 = vmul.f32 %v371, 0.5
    %v377 = vmul.f32 %v371, 0.044715
    %v378 = vmul.f32 %v377, %v371
    %v379 = vmul.f32 %v378, %v371
    %v380 = vadd.f32 %v371, %v379
    %v381 = vmul.f32 %v380, 0.7978846
    %v382 = vtanh.pop %v381
    %v383 = vadd.f32 %v382, 1.0
    %v384 = vmul.f32 %v376, %v383
    %vm385 = vcmask 517120
    %v386 = vsel %vm385, %v384, 0.0
    %387 = vadd.xlane.f32.xlu0 %v386
    %v388 = vpop.xlane.xlu0 %387
    %v389 = vrcp.pop 64.0
    %v390 = vmul.f32 %v388, %v389
    %v391 = vsub.f32 %v384, %v390
    %v392 = vmul.f32 %v391, %v391
    %v393 = vsel %vm385, %v392, 0.0
    %394 = vadd.xlane.f32.xlu0 %v393
    %v395 = vpop.xlane.xlu0 %394
    %v396 = vmul.f32 %v395, %v389
    %v397 = vadd.f32 %v396, 1e-12
    %v398 = vrsqrt.pop %v397
    %v399 = vmul.f32 %v391, %v398
    %v400 = vlaneseq
    %v401 = vshrl.u32 %v400, 7
    %v402 = vsub.s32 1, %v401
    %v403 = vrot.slane %v311, %v402
    %v404 = vmul.f32 %v399, %v403
    %v405 = vlaneseq
    %v406 = vshrl.u32 %v405, 7
    %v407 = vsub.s32 2, %v406
    %v408 = vrot.slane %v311, %v407
    %v409 = vadd.f32 %v404, %v408
    %v410 = vpack.c.bf16 %v409, %v409
    %v411 = vld [vmem:[%s9] sm:$0xf]
    %v412 = vld [vmem:[%s9 + $0x4] sm:$0xf]
    %v413 = vld [vmem:[%s9 + $0x8] sm:$0xf]
    %v414 = vld [vmem:[%s9 + $0xc] sm:$0xf]
    %v415 = vld [vmem:[%s9 + $0x10] sm:$0xf]
    %v416 = vld [vmem:[%s9 + $0x14] sm:$0xf]
    %v417 = vld [vmem:[%s9 + $0x18] sm:$0xf]
    %v418 = vld [vmem:[%s9 + $0x1c] sm:$0xf]
    %v419 = vld [vmem:[%s10] sm:$0x1]
    %v421 = vlaneseq
    %v422 = vshrl.u32 %v421, 7
    %v423 = vsub.s32 0, %v422
    %v424 = vrot.slane %v419, %v423
    %v434 = vunpack.c.l.b16 %v411
    %v435 = vunpack.c.l.b16 %v412
    %v436 = vunpack.c.l.b16 %v413
    %v437 = vunpack.c.l.b16 %v414
    %v438 = vunpack.c.l.b16 %v415
    %v439 = vunpack.c.l.b16 %v416
    %v440 = vunpack.c.l.b16 %v417
    %v441 = vunpack.c.l.b16 %v418
    %v442 = vpack.c.b16 %v435, %v434
    %v443 = vpack.c.b16 %v437, %v436
    %v444 = vpack.c.b16 %v439, %v438
    %v445 = vpack.c.b16 %v441, %v440
    %vm450 = vcmask 523264
    %v452 = vsel %vm450, %v410, 0
    %454 = vmatprep.subr.bf16.mxu0 0
    %455 = vmatpush1.bf16.msra.mxu0 %v442
    %456 = vmatprep.subr.bf16.mxu0 0
    %457 = vmatpush1.bf16.msra.mxu0 %v443
    %458 = vmatprep.subr.bf16.mxu0 0
    %459 = vmatpush1.bf16.msra.mxu0 %v444
    %460 = vmatprep.subr.bf16.mxu0 0
    %461 = vmatpush1.bf16.msra.mxu0 %v445
    %462 = vmatprep.subr.bf16.mxu0 0
    %463 = vmatpush1.bf16.msra.mxu0 0
    %464 = vmatprep.subr.bf16.mxu0 0
    %465 = vmatpush1.bf16.msra.mxu0 0
    %466 = vmatprep.subr.bf16.mxu0 0
    %467 = vmatpush1.bf16.msra.mxu0 0
    %468 = vmatprep.subr.bf16.mxu0 0
    %469 = vmatpush1.bf16.msra.mxu0 0
    %470 = vmatprep.subr.bf16.mxu0 0
    %471 = vmatpush1.bf16.msra.mxu0 0
    %472 = vmatprep.subr.bf16.mxu0 0
    %473 = vmatpush1.bf16.msra.mxu0 0
    %474 = vmatprep.subr.bf16.mxu0 0
    %475 = vmatpush1.bf16.msra.mxu0 0
    %476 = vmatprep.subr.bf16.mxu0 0
    %477 = vmatpush1.bf16.msra.mxu0 0
    %478 = vmatprep.subr.bf16.mxu0 0
    %479 = vmatpush1.bf16.msra.mxu0 0
    %480 = vmatprep.subr.bf16.mxu0 0
    %481 = vmatpush1.bf16.msra.mxu0 0
    %482 = vmatprep.subr.bf16.mxu0 0
    %483 = vmatpush1.bf16.msra.mxu0 0
    %484 = vmatprep.subr.bf16.mxu0 0
    %485 = vmatpush1.bf16.msra.mxu0 0
    %486 = vmatprep.mubr.bf16.mxu0 0
    %487 = vmatmul.mubr.bf16.gmra.mrb[0].mxu0 %v452
    %v488 = vpop.f32.mrb[0].mxu0
    %v489 = vadd.f32 %v424, %v488
    %v490 = vpop.f32.mrb[0].mxu0
    %v491 = vpop.f32.mrb[0].mxu0
    %v492 = vpop.f32.mrb[0].mxu0
    %493 = vdwg.mxu0
    %494 = vst [vmem:[#allocation17] sm:$0x3] %v489
    %v495 = vlaneseq
    %v496 = vand.u32 %v495, 127
    %vm497 = vcmp.lt.s32.totalorder %v496, 4
    %v498 = vsel %vm497, %v489, -1e+30
    %v499 = vsel %vm152, %v498, -inf
    %500 = vmax.xlane.f32.xlu0 %v499
    %v501 = vpop.xlane.xlu0 %500
    %v502 = vsub.f32 %v498, %v501
    %v503 = vmul.f32 %v502, 1.442695
    %v504 = vpow.pop %v503
    %v505 = vsel %vm152, %v504, 0.0
    %506 = vadd.xlane.f32.xlu0 %v505
    %v507 = vpop.xlane.xlu0 %506
    %v508 = vrcp.pop %v507
    %v509 = vmul.f32 %v504, %v508
    %510 = vst [vmem:[#allocation19] sm:$0x3] %v509
    // Predicated region
    $region78: #{tpu_custom_call.1} parent=1 // pred_check
      _
    $region79: #{tpu_custom_call.1} parent=1 // pred_check_branch
      %512 = sbr.rel (0) target = $region81
    $region80: #{tpu_custom_call.1} parent=1 // pred_region
      %s514 = ssub.s32 16, 16
      %515 = vsyncadd [#allocation4], %s514
      %s517 = sshll.u32 [#allocation16], 4
      %s518 = int_to_ptr.vmem [resolvable:$true] %s517
      %520 = dma.vmem_to_hbm [thread:$0]  %s518, 16, %s11, [#allocation4]
    $region81: #{tpu_custom_call.1} parent=1 // pred_fallthru
      _
    // Predicated region
    $region82: #{tpu_custom_call.1} parent=1 // pred_check
      _
    $region83: #{tpu_custom_call.1} parent=1 // pred_check_branch
      %522 = sbr.rel (0) target = $region85
    $region84: #{tpu_custom_call.1} parent=1 // pred_region
      %s524 = ssub.s32 32, 32
      %525 = vsyncadd [#allocation18], %s524
      %s527 = sshll.u32 [#allocation17], 4
      %s528 = int_to_ptr.vmem [resolvable:$true] %s527
      %530 = dma.vmem_to_hbm [thread:$0]  %s528, 32, %s12, [#allocation18]
    $region85: #{tpu_custom_call.1} parent=1 // pred_fallthru
      _
    // Predicated region
    $region86: #{tpu_custom_call.1} parent=1 // pred_check
      _
    $region87: #{tpu_custom_call.1} parent=1 // pred_check_branch
      %532 = sbr.rel (0) target = $region89
    $region88: #{tpu_custom_call.1} parent=1 // pred_region
      %s534 = ssub.s32 32, 32
      %535 = vsyncadd [#allocation18], %s534
      %s537 = sshll.u32 [#allocation19], 4
      %s538 = int_to_ptr.vmem [resolvable:$true] %s537
      %540 = dma.vmem_to_hbm [thread:$0]  %s538, 32, %s13, [#allocation18]
    $region89: #{tpu_custom_call.1} parent=1 // pred_fallthru
      _
    // Predicated region
    $region90: #{tpu_custom_call.1} parent=1 // pred_check
      _
    $region91: #{tpu_custom_call.1} parent=1 // pred_check_branch
      %542 = sbr.rel (0) target = $region93
    $region92: #{tpu_custom_call.1} parent=1 // pred_region
      %543 = dma.done [#allocation4], 16
    $region93: #{tpu_custom_call.1} parent=1 // pred_fallthru
      _
    // Predicated region
    $region94: #{tpu_custom_call.1} parent=1 // pred_check
      _
    $region95: #{tpu_custom_call.1} parent=1 // pred_check_branch
      %545 = sbr.rel (0) target = $region97
    $region96: #{tpu_custom_call.1} parent=1 // pred_region
      %546 = dma.done [#allocation18], 32
    $region97: #{tpu_custom_call.1} parent=1 // pred_fallthru
      _
    // Predicated region
    $region98: #{tpu_custom_call.1} parent=1 // pred_check
      _
    $region99: #{tpu_custom_call.1} parent=1 // pred_check_branch
      %548 = sbr.rel (0) target = $region101
    $region100: #{tpu_custom_call.1} parent=1 // pred_region
      %549 = dma.done [#allocation18], 32
    $region101: #{tpu_custom_call.1} parent=1 // pred_fallthru
      _
    %550 = vsyncpa [#allocation3], 1
    %551 = vsyncpa [#allocation6], 1
    %552 = vsyncpa [#allocation9], 1
    %553 = vsyncpa [#allocation12], 1
    %554 = vsyncpa [#allocation15], 1
    %555 = vsyncpa [#allocation4], 1
    %556 = vsyncpa [#allocation18], 1

</llo_original>
